<compile_context>
chip_gen: v5e
topology: v5e:2x2
jax: 0.10.0
libtpu: 0.0.40
codegen_flags: <defaults>
</compile_context>

<pallas_src>
import functools

import jax
import jax.numpy as jnp
from jax.experimental import pallas as pl
from jax.experimental.pallas import tpu as pltpu


# ----------------------------------------------------------------------------
# Helpers
# ----------------------------------------------------------------------------

def _round_up(v, m):
    return ((v + m - 1) // m) * m


def _padded_vmem_bytes(shape, itemsize):
    """Tile-aware VMEM footprint: second-minor rounded to the sublane packing
    granularity (8 for 4B, 16 for 2B, 32 for 1B), minor rounded to 128 lanes."""
    shape = tuple(int(s) for s in shape)
    if len(shape) == 0:
        shape = (1, 1)
    elif len(shape) == 1:
        shape = (1, shape[0])
    sub_gran = {4: 8, 2: 16, 1: 32}.get(itemsize, 8)
    lead = 1
    for s in shape[:-2]:
        lead *= s
    return lead * _round_up(shape[-2], sub_gran) * _round_up(shape[-1], 128) * itemsize


def _default_vmem_budget_bytes():
    """~70% of per-TensorCore VMEM; fallback sized for the smallest gen (v7x, 64 MiB)."""
    try:
        cap = int(pltpu.get_tpu_info().vmem_capacity_bytes)
        return int(cap * 0.7)
    except Exception:
        return int(0.7 * 64 * 1024 * 1024)


_BF16_WEIGHT_THRESHOLD_BYTES = 64 * 1024  # padded-f32 size above which a weight goes bf16


def _maybe_bf16(w):
    """Cast large weights to bf16 at the call boundary (halves the dominant DMA);
    small weights stay f32 so their bias-add path stays pure f32."""
    if _padded_vmem_bytes(w.shape, 4) > _BF16_WEIGHT_THRESHOLD_BYTES:
        return w.astype(jnp.bfloat16)
    return w.astype(jnp.float32)


# ----------------------------------------------------------------------------
# Kernel
# ----------------------------------------------------------------------------

def _fused_mlp_kernel(x_ref, bpack_ref, *rest, out_dims):
    """Fused MLP head: x -> [Linear -> ReLU] * (L-1) -> Linear.

    rest = (w_0, w_1, ..., w_{L-1}, o_ref). All operands are whole arrays
    resident in VMEM (no grid); inter-layer activations stay in vregs/VMEM.
    bpack_ref is an (L, N_max) f32 pack of all biases (one DMA instead of L).
    MXU operands may be bf16; accumulation, bias add and ReLU are f32.
    """
    o_ref = rest[-1]
    w_refs = rest[:-1]
    n_layers = len(w_refs)

    bp = bpack_ref[...]          # (L, N_max) f32, tiny
    h = x_ref[...]
    for i in range(n_layers):
        w = w_refs[i][...]
        lhs = h if h.dtype == w.dtype else h.astype(w.dtype)   # bf16 only for MXU feed
        h = jnp.dot(lhs, w, preferred_element_type=jnp.float32)
        h = h + bp[i : i + 1, : out_dims[i]]                   # f32 bias add, broadcasts rows
        if i < n_layers - 1:
            h = jnp.maximum(h, 0.0)                            # ReLU on hidden layers only
    o_ref[...] = h.astype(o_ref.dtype)


# ----------------------------------------------------------------------------
# Wrapper
# ----------------------------------------------------------------------------

def mlp_head_forward(x, params, *, vmem_budget_bytes=None):
    """MLPHead.forward: flatten(1) if ndim > 2, then Linear (+ReLU except last).

    Single fused pallas_call with no grid: x, all weights/biases and the output
    are placed whole in VMEM; activations flow layer-to-layer inside the kernel.
    """
    if x.ndim > 2:
        x = x.reshape(x.shape[0], -1)

    M = int(x.shape[0])
    n_layers = len(params)
    out_dims = tuple(int(w.shape[1]) for w, _ in params)
    n_out = out_dims[-1]
    n_max = max(out_dims)

    if vmem_budget_bytes is None:
        vmem_budget_bytes = _default_vmem_budget_bytes()

    # Weight dtype policy: big weights bf16 (DMA-bound kernel), small ones f32.
    weights = [_maybe_bf16(w) for w, _ in params]

    # Pack all biases into one padded f32 operand (fewer tiny DMAs).
    bpack = jnp.zeros((n_layers, n_max), jnp.float32)
    for i, (_, b) in enumerate(params):
        bpack = bpack.at[i, : b.shape[0]].set(b.astype(jnp.float32))

    # Tile-aware whole-in-VMEM footprint check.
    footprint = _padded_vmem_bytes(x.shape, x.dtype.itemsize)
    footprint += _padded_vmem_bytes(bpack.shape, 4)
    for w in weights:
        footprint += _padded_vmem_bytes(w.shape, w.dtype.itemsize)
    for n in out_dims:
        footprint += _padded_vmem_bytes((M, n), 4)              # f32 per-layer activation
    footprint += _padded_vmem_bytes((M, n_out), x.dtype.itemsize)  # output buffer
    # TODO(synk): for large flattened C*H*W / large M, add an M/K/N-tiled per-layer
    # path (leading M axis "parallel" for v7x's 2 TCs, K reduction last/"arbitrary",
    # lane-dense packed-N output, halved K/N blocks on v7x's 64 MiB VMEM).
    assert footprint <= vmem_budget_bytes, (
        f"fused MLP head does not fit VMEM budget: {footprint} > {vmem_budget_bytes} bytes"
    )

    flops = 2 * M * sum(int(w.shape[0]) * int(w.shape[1]) for w in weights)
    bytes_accessed = (
        x.size * x.dtype.itemsize
        + bpack.size * 4
        + sum(w.size * w.dtype.itemsize for w in weights)
        + M * n_out * x.dtype.itemsize
    )

    kernel = functools.partial(_fused_mlp_kernel, out_dims=out_dims)

    return pl.pallas_call(
        kernel,
        out_shape=jax.ShapeDtypeStruct((M, n_out), x.dtype),
        compiler_params=pltpu.CompilerParams(
            vmem_limit_bytes=int(vmem_budget_bytes),
        ),
        cost_estimate=pl.CostEstimate(
            flops=flops, transcendentals=0, bytes_accessed=bytes_accessed,
        ),
    )(x, bpack, *weights)


# ----------------------------------------------------------------------------
# Parameter init (mirrors MLPHead.__init__ / init_weights)
# ----------------------------------------------------------------------------

def init_mlp_head_params(dims, key):
    """Weights: xavier (Glorot) normal. Bias: PyTorch Linear default
    uniform(-1/sqrt(fan_in), 1/sqrt(fan_in)). Weights stored (fan_in, fan_out)
    so the kernel does x @ w directly."""
    params = []
    for dim_in, dim_out in zip(dims[:-1], dims[1:]):
        key, wk, bk = jax.random.split(key, 3)
        std = (2.0 / (dim_in + dim_out)) ** 0.5  # xavier normal, gain=1
        w = std * jax.random.normal(wk, (dim_in, dim_out), dtype=jnp.float32)
        bound = 1.0 / (dim_in ** 0.5)
        b = jax.random.uniform(
            bk, (dim_out,), minval=-bound, maxval=bound, dtype=jnp.float32
        )
        params.append((w, b))
    return params


if __name__ == "__main__":
    key = jax.random.PRNGKey(0)
    kx, kp = jax.random.split(key)

    # Input: NCHW (batch=2, channels=4, spatial=16x16) -> flattened dim 1024.
    x = jax.random.normal(kx, (2, 4, 16, 16), dtype=jnp.float32)
    dims = [4 * 16 * 16, 32, 8]  # MLPHead(dims=[1024, 32, 8])

    params = init_mlp_head_params(dims, kp)

    out = mlp_head_forward(x, params)
    out = jax.block_until_ready(out)

    # Reference mirroring the kernel's numerics (same bf16 weight-cast policy,
    # f32 accumulation, f32 bias add / ReLU).
    ref = x.reshape(x.shape[0], -1)
    for i, (w, b) in enumerate(params):
        w_used = _maybe_bf16(w)
        lhs = ref if ref.dtype == w_used.dtype else ref.astype(w_used.dtype)
        ref = jnp.dot(lhs, w_used, preferred_element_type=jnp.float32) + b
        if i < len(params) - 1:
            ref = jnp.maximum(ref, 0.0)

    assert out.shape == (2, 8), out.shape
    assert jnp.allclose(out, ref, atol=1e-3, rtol=1e-3), "mismatch vs reference"

    # TODO(synk): dropout (p=0.0 default) omitted — inference semantics.
    print("KERNEL_OK")
</pallas_src>

<mosaic_0001>
module attributes {stable_mosaic.version = 11 : i64} {
  func.func @_fused_mlp_kernel(%arg0: memref<2x1024xf32, #tpu.memory_space<vmem>>, %arg1: memref<2x32xf32, #tpu.memory_space<vmem>>, %arg2: memref<1024x32xbf16, #tpu.memory_space<vmem>>, %arg3: memref<32x8xf32, #tpu.memory_space<vmem>>, %arg4: memref<2x8xf32, #tpu.memory_space<vmem>>) attributes {dimension_semantics = [], scalar_prefetch = 0 : i64, scratch_operands = 0 : i64, tpu.core_type = #tpu.core_type<tc>} {
    %c0 = arith.constant 0 : index
    %c0_0 = arith.constant 0 : index
    %0 = vector.load %arg1[%c0, %c0_0] : memref<2x32xf32, #tpu.memory_space<vmem>>, vector<2x32xf32>
    %c0_1 = arith.constant 0 : index
    %c0_2 = arith.constant 0 : index
    %1 = vector.load %arg0[%c0_1, %c0_2] : memref<2x1024xf32, #tpu.memory_space<vmem>>, vector<2x1024xf32>
    %c0_3 = arith.constant 0 : index
    %c0_4 = arith.constant 0 : index
    %2 = vector.load %arg2[%c0_3, %c0_4] : memref<1024x32xbf16, #tpu.memory_space<vmem>>, vector<1024x32xbf16>
    %3 = arith.truncf %1 : vector<2x1024xf32> to vector<2x1024xbf16>
    %cst = arith.constant dense<0.000000e+00> : vector<2x32xf32>
    %4 = tpu.matmul %3, %2, %cst {dimension_numbers = #tpu.dot_dimension_numbers<[1], [0], [0], [1], [0, 0, 1, 1], [], []>} : vector<2x1024xbf16>, vector<1024x32xbf16>, vector<2x32xf32> -> vector<2x32xf32>
    %5 = vector.extract_strided_slice %0 {offsets = [0, 0], sizes = [1, 32], strides = [1, 1]} : vector<2x32xf32> to vector<1x32xf32>
    %6 = vector.broadcast %5 : vector<1x32xf32> to vector<2x32xf32>
    %7 = arith.addf %4, %6 : vector<2x32xf32>
    %cst_5 = arith.constant 0.000000e+00 : f32
    %8 = vector.broadcast %cst_5 : f32 to vector<2x32xf32>
    %9 = arith.maximumf %7, %8 : vector<2x32xf32>
    %c0_6 = arith.constant 0 : index
    %c0_7 = arith.constant 0 : index
    %10 = vector.load %arg3[%c0_6, %c0_7] : memref<32x8xf32, #tpu.memory_space<vmem>>, vector<32x8xf32>
    %cst_8 = arith.constant dense<0.000000e+00> : vector<2x8xf32>
    %11 = tpu.matmul %9, %10, %cst_8 {dimension_numbers = #tpu.dot_dimension_numbers<[1], [0], [0], [1], [0, 0, 1, 1], [], []>} : vector<2x32xf32>, vector<32x8xf32>, vector<2x8xf32> -> vector<2x8xf32>
    %12 = vector.extract_strided_slice %0 {offsets = [1, 0], sizes = [1, 8], strides = [1, 1]} : vector<2x32xf32> to vector<1x8xf32>
    %13 = vector.broadcast %12 : vector<1x8xf32> to vector<2x8xf32>
    %14 = arith.addf %11, %13 : vector<2x8xf32>
    %c0_9 = arith.constant 0 : index
    %c0_10 = arith.constant 0 : index
    %15 = vector.load %arg4[%c0_9, %c0_10] : memref<2x8xf32, #tpu.memory_space<vmem>>, vector<2x8xf32>
    tpu.vector_store %arg4[%c0_9, %c0_10], %14 {strides = array<i32>} : memref<2x8xf32, #tpu.memory_space<vmem>>, vector<2x8xf32>,
    return
  }
}

</mosaic_0001>

<llo_original>
// kernel: tpu_custom_call.1
$region0: #{tpu_custom_call.1}
  #allocation0 [shape = 'u32[]', space=smem, size = 0x4, offset = 0x4, fixed_abs, tag = 'smem constant byte address 0x4 - core index']
  #allocation1 [shape = 'u32[72,128]{1,0:T(1,128)}', space=vmem, size = 0x9000, scoped, tag = 'internal scratch']
  %s0 = inlined_call_operand.vmem [shape: f32[2,1024], index: 0, kind: input, shape index: {}]
  %s1 = inlined_call_operand.vmem [shape: f32[2,32], index: 1, kind: input, shape index: {}]
  %s2 = inlined_call_operand.vmem [shape: bf16[1024,32], index: 2, kind: input, shape index: {}]
  %s3 = inlined_call_operand.vmem [shape: f32[32,8], index: 3, kind: input, shape index: {}]
  %s4 = inlined_call_operand.hbm [shape: f32[2,8], index: 4, kind: output, shape index: {}]
  %s5 = sld [smem:[#allocation0]]
  $region26: #{tpu_custom_call.1} parent=0
    _
  %s7 = ssub.s32 1, %s5
  %s8 = scalar_select 0, %s7, %s5
  $region1: #{tpu_custom_call.1} parent=0
    #allocation2 [shape = 'u8[1024]{0}', space=vmem, size = 0x400, scoped, tag = 'output window, operand 0, single buffered']
    #allocation3 [shape = 's32[1]{0}', space=sflag, size = 0x4, scoped, tag = 'scoped memory for tpu_custom_call.1']
    %9 = vsyncpa [#allocation3], 0
    // Predicated region
    $region2: #{tpu_custom_call.1} parent=1 // pred_check
      _
    $region3: #{tpu_custom_call.1} parent=1 // pred_check_branch
      %11 = sbr.rel (0) target = $region5
    $region4: #{tpu_custom_call.1} parent=1 // pred_region
      _
    $region5: #{tpu_custom_call.1} parent=1 // pred_fallthru
      _
    // Predicated region
    $region6: #{tpu_custom_call.1} parent=1 // pred_check
      _
    $region7: #{tpu_custom_call.1} parent=1 // pred_check_branch
      %13 = sbr.rel (0) target = $region9
    $region8: #{tpu_custom_call.1} parent=1 // pred_region
      _
    $region9: #{tpu_custom_call.1} parent=1 // pred_fallthru
      _
    // Predicated region
    $region10: #{tpu_custom_call.1} parent=1 // pred_check
      _
    $region11: #{tpu_custom_call.1} parent=1 // pred_check_branch
      %15 = sbr.rel (0) target = $region13
    $region12: #{tpu_custom_call.1} parent=1 // pred_region
      _
    $region13: #{tpu_custom_call.1} parent=1 // pred_fallthru
      _
    // Predicated region
    $region14: #{tpu_custom_call.1} parent=1 // pred_check
      _
    $region15: #{tpu_custom_call.1} parent=1 // pred_check_branch
      %17 = sbr.rel (0) target = $region17
    $region16: #{tpu_custom_call.1} parent=1 // pred_region
      _
    $region17: #{tpu_custom_call.1} parent=1 // pred_fallthru
      _
    %v18 = vld [vmem:[%s1] sm:$0x3]
    %v19 = vld [vmem:[%s0] sm:$0xff]
    %v20 = vld [vmem:[%s0 + $0x8] sm:$0xff]
    %v21 = vld [vmem:[%s2] sm:$0xf]
    %v22 = vld [vmem:[%s2 + $0x4] sm:$0xf]
    %v23 = vld [vmem:[%s2 + $0x8] sm:$0xf]
    %v24 = vld [vmem:[%s2 + $0xc] sm:$0xf]
    %v25 = vld [vmem:[%s2 + $0x10] sm:$0xf]
    %v26 = vld [vmem:[%s2 + $0x14] sm:$0xf]
    %v27 = vld [vmem:[%s2 + $0x18] sm:$0xf]
    %v28 = vld [vmem:[%s2 + $0x1c] sm:$0xf]
    %v29 = vld [vmem:[%s2 + $0x20] sm:$0xf]
    %v30 = vld [vmem:[%s2 + $0x24] sm:$0xf]
    %v31 = vld [vmem:[%s2 + $0x28] sm:$0xf]
    %v32 = vld [vmem:[%s2 + $0x2c] sm:$0xf]
    %v33 = vld [vmem:[%s2 + $0x30] sm:$0xf]
    %v34 = vld [vmem:[%s2 + $0x34] sm:$0xf]
    %v35 = vld [vmem:[%s2 + $0x38] sm:$0xf]
    %v36 = vld [vmem:[%s2 + $0x3c] sm:$0xf]
    %v37 = vld [vmem:[%s2 + $0x40] sm:$0xf]
    %v38 = vld [vmem:[%s2 + $0x44] sm:$0xf]
    %v39 = vld [vmem:[%s2 + $0x48] sm:$0xf]
    %v40 = vld [vmem:[%s2 + $0x4c] sm:$0xf]
    %v41 = vld [vmem:[%s2 + $0x50] sm:$0xf]
    %v42 = vld [vmem:[%s2 + $0x54] sm:$0xf]
    %v43 = vld [vmem:[%s2 + $0x58] sm:$0xf]
    %v44 = vld [vmem:[%s2 + $0x5c] sm:$0xf]
    %v45 = vld [vmem:[%s2 + $0x60] sm:$0xf]
    %v46 = vld [vmem:[%s2 + $0x64] sm:$0xf]
    %v47 = vld [vmem:[%s2 + $0x68] sm:$0xf]
    %v48 = vld [vmem:[%s2 + $0x6c] sm:$0xf]
    %v49 = vld [vmem:[%s2 + $0x70] sm:$0xf]
    %v50 = vld [vmem:[%s2 + $0x74] sm:$0xf]
    %v51 = vld [vmem:[%s2 + $0x78] sm:$0xf]
    %v52 = vld [vmem:[%s2 + $0x7c] sm:$0xf]
    %v53 = vld [vmem:[%s2 + $0x80] sm:$0xf]
    %v54 = vld [vmem:[%s2 + $0x84] sm:$0xf]
    %v55 = vld [vmem:[%s2 + $0x88] sm:$0xf]
    %v56 = vld [vmem:[%s2 + $0x8c] sm:$0xf]
    %v57 = vld [vmem:[%s2 + $0x90] sm:$0xf]
    %v58 = vld [vmem:[%s2 + $0x94] sm:$0xf]
    %v59 = vld [vmem:[%s2 + $0x98] sm:$0xf]
    %v60 = vld [vmem:[%s2 + $0x9c] sm:$0xf]
    %v61 = vld [vmem:[%s2 + $0xa0] sm:$0xf]
    %v62 = vld [vmem:[%s2 + $0xa4] sm:$0xf]
    %v63 = vld [vmem:[%s2 + $0xa8] sm:$0xf]
    %v64 = vld [vmem:[%s2 + $0xac] sm:$0xf]
    %v65 = vld [vmem:[%s2 + $0xb0] sm:$0xf]
    %v66 = vld [vmem:[%s2 + $0xb4] sm:$0xf]
    %v67 = vld [vmem:[%s2 + $0xb8] sm:$0xf]
    %v68 = vld [vmem:[%s2 + $0xbc] sm:$0xf]
    %v69 = vld [vmem:[%s2 + $0xc0] sm:$0xf]
    %v70 = vld [vmem:[%s2 + $0xc4] sm:$0xf]
    %v71 = vld [vmem:[%s2 + $0xc8] sm:$0xf]
    %v72 = vld [vmem:[%s2 + $0xcc] sm:$0xf]
    %v73 = vld [vmem:[%s2 + $0xd0] sm:$0xf]
    %v74 = vld [vmem:[%s2 + $0xd4] sm:$0xf]
    %v75 = vld [vmem:[%s2 + $0xd8] sm:$0xf]
    %v76 = vld [vmem:[%s2 + $0xdc] sm:$0xf]
    %v77 = vld [vmem:[%s2 + $0xe0] sm:$0xf]
    %v78 = vld [vmem:[%s2 + $0xe4] sm:$0xf]
    %v79 = vld [vmem:[%s2 + $0xe8] sm:$0xf]
    %v80 = vld [vmem:[%s2 + $0xec] sm:$0xf]
    %v81 = vld [vmem:[%s2 + $0xf0] sm:$0xf]
    %v82 = vld [vmem:[%s2 + $0xf4] sm:$0xf]
    %v83 = vld [vmem:[%s2 + $0xf8] sm:$0xf]
    %v84 = vld [vmem:[%s2 + $0xfc] sm:$0xf]
    %v85 = vld [vmem:[%s2 + $0x100] sm:$0xf]
    %v86 = vld [vmem:[%s2 + $0x104] sm:$0xf]
    %v87 = vld [vmem:[%s2 + $0x108] sm:$0xf]
    %v88 = vld [vmem:[%s2 + $0x10c] sm:$0xf]
    %v89 = vld [vmem:[%s2 + $0x110] sm:$0xf]
    %v90 = vld [vmem:[%s2 + $0x114] sm:$0xf]
    %v91 = vld [vmem:[%s2 + $0x118] sm:$0xf]
    %v92 = vld [vmem:[%s2 + $0x11c] sm:$0xf]
    %v93 = vld [vmem:[%s2 + $0x120] sm:$0xf]
    %v94 = vld [vmem:[%s2 + $0x124] sm:$0xf]
    %v95 = vld [vmem:[%s2 + $0x128] sm:$0xf]
    %v96 = vld [vmem:[%s2 + $0x12c] sm:$0xf]
    %v97 = vld [vmem:[%s2 + $0x130] sm:$0xf]
    %v98 = vld [vmem:[%s2 + $0x134] sm:$0xf]
    %v99 = vld [vmem:[%s2 + $0x138] sm:$0xf]
    %v100 = vld [vmem:[%s2 + $0x13c] sm:$0xf]
    %v101 = vld [vmem:[%s2 + $0x140] sm:$0xf]
    %v102 = vld [vmem:[%s2 + $0x144] sm:$0xf]
    %v103 = vld [vmem:[%s2 + $0x148] sm:$0xf]
    %v104 = vld [vmem:[%s2 + $0x14c] sm:$0xf]
    %v105 = vld [vmem:[%s2 + $0x150] sm:$0xf]
    %v106 = vld [vmem:[%s2 + $0x154] sm:$0xf]
    %v107 = vld [vmem:[%s2 + $0x158] sm:$0xf]
    %v108 = vld [vmem:[%s2 + $0x15c] sm:$0xf]
    %v109 = vld [vmem:[%s2 + $0x160] sm:$0xf]
    %v110 = vld [vmem:[%s2 + $0x164] sm:$0xf]
    %v111 = vld [vmem:[%s2 + $0x168] sm:$0xf]
    %v112 = vld [vmem:[%s2 + $0x16c] sm:$0xf]
    %v113 = vld [vmem:[%s2 + $0x170] sm:$0xf]
    %v114 = vld [vmem:[%s2 + $0x174] sm:$0xf]
    %v115 = vld [vmem:[%s2 + $0x178] sm:$0xf]
    %v116 = vld [vmem:[%s2 + $0x17c] sm:$0xf]
    %v117 = vld [vmem:[%s2 + $0x180] sm:$0xf]
    %v118 = vld [vmem:[%s2 + $0x184] sm:$0xf]
    %v119 = vld [vmem:[%s2 + $0x188] sm:$0xf]
    %v120 = vld [vmem:[%s2 + $0x18c] sm:$0xf]
    %v121 = vld [vmem:[%s2 + $0x190] sm:$0xf]
    %v122 = vld [vmem:[%s2 + $0x194] sm:$0xf]
    %v123 = vld [vmem:[%s2 + $0x198] sm:$0xf]
    %v124 = vld [vmem:[%s2 + $0x19c] sm:$0xf]
    %v125 = vld [vmem:[%s2 + $0x1a0] sm:$0xf]
    %v126 = vld [vmem:[%s2 + $0x1a4] sm:$0xf]
    %v127 = vld [vmem:[%s2 + $0x1a8] sm:$0xf]
    %v128 = vld [vmem:[%s2 + $0x1ac] sm:$0xf]
    %v129 = vld [vmem:[%s2 + $0x1b0] sm:$0xf]
    %v130 = vld [vmem:[%s2 + $0x1b4] sm:$0xf]
    %v131 = vld [vmem:[%s2 + $0x1b8] sm:$0xf]
    %v132 = vld [vmem:[%s2 + $0x1bc] sm:$0xf]
    %v133 = vld [vmem:[%s2 + $0x1c0] sm:$0xf]
    %v134 = vld [vmem:[%s2 + $0x1c4] sm:$0xf]
    %v135 = vld [vmem:[%s2 + $0x1c8] sm:$0xf]
    %v136 = vld [vmem:[%s2 + $0x1cc] sm:$0xf]
    %v137 = vld [vmem:[%s2 + $0x1d0] sm:$0xf]
    %v138 = vld [vmem:[%s2 + $0x1d4] sm:$0xf]
    %v139 = vld [vmem:[%s2 + $0x1d8] sm:$0xf]
    %v140 = vld [vmem:[%s2 + $0x1dc] sm:$0xf]
    %v141 = vld [vmem:[%s2 + $0x1e0] sm:$0xf]
    %v142 = vld [vmem:[%s2 + $0x1e4] sm:$0xf]
    %v143 = vld [vmem:[%s2 + $0x1e8] sm:$0xf]
    %v144 = vld [vmem:[%s2 + $0x1ec] sm:$0xf]
    %v145 = vld [vmem:[%s2 + $0x1f0] sm:$0xf]
    %v146 = vld [vmem:[%s2 + $0x1f4] sm:$0xf]
    %v147 = vld [vmem:[%s2 + $0x1f8] sm:$0xf]
    %v148 = vld [vmem:[%s2 + $0x1fc] sm:$0xf]
    %151 = vst [vmem:[#allocation1] ss:$4 sm:$0xff] %v19
    %s152 = scalar_lea.vmem [#allocation1], 32
    %153 = vst [vmem:[%s152] ss:$4 sm:$0xff] %v20
    %v154 = vld.sshfl [vmem:[#allocation1] sm:$0xff pattern:$0x73625140]
    %v155 = vld.sshfl [vmem:[#allocation1 + $0x8] sm:$0xff pattern:$0x73625140]
    %v156 = vld.sshfl [vmem:[#allocation1 + $0x10] sm:$0xff pattern:$0x73625140]
    %v157 = vld.sshfl [vmem:[#allocation1 + $0x18] sm:$0xff pattern:$0x73625140]
    %v158 = vld.sshfl [vmem:[#allocation1 + $0x20] sm:$0xff pattern:$0x73625140]
    %v159 = vld.sshfl [vmem:[#allocation1 + $0x28] sm:$0xff pattern:$0x73625140]
    %v160 = vld.sshfl [vmem:[#allocation1 + $0x30] sm:$0xff pattern:$0x73625140]
    %v161 = vld.sshfl [vmem:[#allocation1 + $0x38] sm:$0xff pattern:$0x73625140]
    %v170 = vpack.c.bf16 %v154, %v154
    %v171 = vpack.c.bf16 %v155, %v155
    %v172 = vpack.c.bf16 %v156, %v156
    %v173 = vpack.c.bf16 %v157, %v157
    %v174 = vpack.c.bf16 %v158, %v158
    %v175 = vpack.c.bf16 %v159, %v159
    %v176 = vpack.c.bf16 %v160, %v160
    %v177 = vpack.c.bf16 %v161, %v161
    %v178 = vperm.slane %v18, 0
    %v307 = vunpack.c.l.b16 %v21
    %v308 = vunpack.c.l.b16 %v22
    %v309 = vunpack.c.l.b16 %v23
    %v310 = vunpack.c.l.b16 %v24
    %v311 = vunpack.c.l.b16 %v25
    %v312 = vunpack.c.l.b16 %v26
    %v313 = vunpack.c.l.b16 %v27
    %v314 = vunpack.c.l.b16 %v28
    %v315 = vunpack.c.l.b16 %v29
    %v316 = vunpack.c.l.b16 %v30
    %v317 = vunpack.c.l.b16 %v31
    %v318 = vunpack.c.l.b16 %v32
    %v319 = vunpack.c.l.b16 %v33
    %v320 = vunpack.c.l.b16 %v34
    %v321 = vunpack.c.l.b16 %v35
    %v322 = vunpack.c.l.b16 %v36
    %v323 = vunpack.c.l.b16 %v37
    %v324 = vunpack.c.l.b16 %v38
    %v325 = vunpack.c.l.b16 %v39
    %v326 = vunpack.c.l.b16 %v40
    %v327 = vunpack.c.l.b16 %v41
    %v328 = vunpack.c.l.b16 %v42
    %v329 = vunpack.c.l.b16 %v43
    %v330 = vunpack.c.l.b16 %v44
    %v331 = vunpack.c.l.b16 %v45
    %v332 = vunpack.c.l.b16 %v46
    %v333 = vunpack.c.l.b16 %v47
    %v334 = vunpack.c.l.b16 %v48
    %v335 = vunpack.c.l.b16 %v49
    %v336 = vunpack.c.l.b16 %v50
    %v337 = vunpack.c.l.b16 %v51
    %v338 = vunpack.c.l.b16 %v52
    %v339 = vunpack.c.l.b16 %v53
    %v340 = vunpack.c.l.b16 %v54
    %v341 = vunpack.c.l.b16 %v55
    %v342 = vunpack.c.l.b16 %v56
    %v343 = vunpack.c.l.b16 %v57
    %v344 = vunpack.c.l.b16 %v58
    %v345 = vunpack.c.l.b16 %v59
    %v346 = vunpack.c.l.b16 %v60
    %v347 = vunpack.c.l.b16 %v61
    %v348 = vunpack.c.l.b16 %v62
    %v349 = vunpack.c.l.b16 %v63
    %v350 = vunpack.c.l.b16 %v64
    %v351 = vunpack.c.l.b16 %v65
    %v352 = vunpack.c.l.b16 %v66
    %v353 = vunpack.c.l.b16 %v67
    %v354 = vunpack.c.l.b16 %v68
    %v355 = vunpack.c.l.b16 %v69
    %v356 = vunpack.c.l.b16 %v70
    %v357 = vunpack.c.l.b16 %v71
    %v358 = vunpack.c.l.b16 %v72
    %v359 = vunpack.c.l.b16 %v73
    %v360 = vunpack.c.l.b16 %v74
    %v361 = vunpack.c.l.b16 %v75
    %v362 = vunpack.c.l.b16 %v76
    %v363 = vunpack.c.l.b16 %v77
    %v364 = vunpack.c.l.b16 %v78
    %v365 = vunpack.c.l.b16 %v79
    %v366 = vunpack.c.l.b16 %v80
    %v367 = vunpack.c.l.b16 %v81
    %v368 = vunpack.c.l.b16 %v82
    %v369 = vunpack.c.l.b16 %v83
    %v370 = vunpack.c.l.b16 %v84
    %v371 = vunpack.c.l.b16 %v85
    %v372 = vunpack.c.l.b16 %v86
    %v373 = vunpack.c.l.b16 %v87
    %v374 = vunpack.c.l.b16 %v88
    %v375 = vunpack.c.l.b16 %v89
    %v376 = vunpack.c.l.b16 %v90
    %v377 = vunpack.c.l.b16 %v91
    %v378 = vunpack.c.l.b16 %v92
    %v379 = vunpack.c.l.b16 %v93
    %v380 = vunpack.c.l.b16 %v94
    %v381 = vunpack.c.l.b16 %v95
    %v382 = vunpack.c.l.b16 %v96
    %v383 = vunpack.c.l.b16 %v97
    %v384 = vunpack.c.l.b16 %v98
    %v385 = vunpack.c.l.b16 %v99
    %v386 = vunpack.c.l.b16 %v100
    %v387 = vunpack.c.l.b16 %v101
    %v388 = vunpack.c.l.b16 %v102
    %v389 = vunpack.c.l.b16 %v103
    %v390 = vunpack.c.l.b16 %v104
    %v391 = vunpack.c.l.b16 %v105
    %v392 = vunpack.c.l.b16 %v106
    %v393 = vunpack.c.l.b16 %v107
    %v394 = vunpack.c.l.b16 %v108
    %v395 = vunpack.c.l.b16 %v109
    %v396 = vunpack.c.l.b16 %v110
    %v397 = vunpack.c.l.b16 %v111
    %v398 = vunpack.c.l.b16 %v112
    %v399 = vunpack.c.l.b16 %v113
    %v400 = vunpack.c.l.b16 %v114
    %v401 = vunpack.c.l.b16 %v115
    %v402 = vunpack.c.l.b16 %v116
    %v403 = vunpack.c.l.b16 %v117
    %v404 = vunpack.c.l.b16 %v118
    %v405 = vunpack.c.l.b16 %v119
    %v406 = vunpack.c.l.b16 %v120
    %v407 = vunpack.c.l.b16 %v121
    %v408 = vunpack.c.l.b16 %v122
    %v409 = vunpack.c.l.b16 %v123
    %v410 = vunpack.c.l.b16 %v124
    %v411 = vunpack.c.l.b16 %v125
    %v412 = vunpack.c.l.b16 %v126
    %v413 = vunpack.c.l.b16 %v127
    %v414 = vunpack.c.l.b16 %v128
    %v415 = vunpack.c.l.b16 %v129
    %v416 = vunpack.c.l.b16 %v130
    %v417 = vunpack.c.l.b16 %v131
    %v418 = vunpack.c.l.b16 %v132
    %v419 = vunpack.c.l.b16 %v133
    %v420 = vunpack.c.l.b16 %v134
    %v421 = vunpack.c.l.b16 %v135
    %v422 = vunpack.c.l.b16 %v136
    %v423 = vunpack.c.l.b16 %v137
    %v424 = vunpack.c.l.b16 %v138
    %v425 = vunpack.c.l.b16 %v139
    %v426 = vunpack.c.l.b16 %v140
    %v427 = vunpack.c.l.b16 %v141
    %v428 = vunpack.c.l.b16 %v142
    %v429 = vunpack.c.l.b16 %v143
    %v430 = vunpack.c.l.b16 %v144
    %v431 = vunpack.c.l.b16 %v145
    %v432 = vunpack.c.l.b16 %v146
    %v433 = vunpack.c.l.b16 %v147
    %v434 = vunpack.c.l.b16 %v148
    %v435 = vpack.c.b16 %v308, %v307
    %v436 = vpack.c.b16 %v310, %v309
    %v437 = vpack.c.b16 %v312, %v311
    %v438 = vpack.c.b16 %v314, %v313
    %v439 = vpack.c.b16 %v316, %v315
    %v440 = vpack.c.b16 %v318, %v317
    %v441 = vpack.c.b16 %v320, %v319
    %v442 = vpack.c.b16 %v322, %v321
    %v443 = vpack.c.b16 %v324, %v323
    %v444 = vpack.c.b16 %v326, %v325
    %v445 = vpack.c.b16 %v328, %v327
    %v446 = vpack.c.b16 %v330, %v329
    %v447 = vpack.c.b16 %v332, %v331
    %v448 = vpack.c.b16 %v334, %v333
    %v449 = vpack.c.b16 %v336, %v335
    %v450 = vpack.c.b16 %v338, %v337
    %v451 = vpack.c.b16 %v340, %v339
    %v452 = vpack.c.b16 %v342, %v341
    %v453 = vpack.c.b16 %v344, %v343
    %v454 = vpack.c.b16 %v346, %v345
    %v455 = vpack.c.b16 %v348, %v347
    %v456 = vpack.c.b16 %v350, %v349
    %v457 = vpack.c.b16 %v352, %v351
    %v458 = vpack.c.b16 %v354, %v353
    %v459 = vpack.c.b16 %v356, %v355
    %v460 = vpack.c.b16 %v358, %v357
    %v461 = vpack.c.b16 %v360, %v359
    %v462 = vpack.c.b16 %v362, %v361
    %v463 = vpack.c.b16 %v364, %v363
    %v464 = vpack.c.b16 %v366, %v365
    %v465 = vpack.c.b16 %v368, %v367
    %v466 = vpack.c.b16 %v370, %v369
    %v467 = vpack.c.b16 %v372, %v371
    %v468 = vpack.c.b16 %v374, %v373
    %v469 = vpack.c.b16 %v376, %v375
    %v470 = vpack.c.b16 %v378, %v377
    %v471 = vpack.c.b16 %v380, %v379
    %v472 = vpack.c.b16 %v382, %v381
    %v473 = vpack.c.b16 %v384, %v383
    %v474 = vpack.c.b16 %v386, %v385
    %v475 = vpack.c.b16 %v388, %v387
    %v476 = vpack.c.b16 %v390, %v389
    %v477 = vpack.c.b16 %v392, %v391
    %v478 = vpack.c.b16 %v394, %v393
    %v479 = vpack.c.b16 %v396, %v395
    %v480 = vpack.c.b16 %v398, %v397
    %v481 = vpack.c.b16 %v400, %v399
    %v482 = vpack.c.b16 %v402, %v401
    %v483 = vpack.c.b16 %v404, %v403
    %v484 = vpack.c.b16 %v406, %v405
    %v485 = vpack.c.b16 %v408, %v407
    %v486 = vpack.c.b16 %v410, %v409
    %v487 = vpack.c.b16 %v412, %v411
    %v488 = vpack.c.b16 %v414, %v413
    %v489 = vpack.c.b16 %v416, %v415
    %v490 = vpack.c.b16 %v418, %v417
    %v491 = vpack.c.b16 %v420, %v419
    %v492 = vpack.c.b16 %v422, %v421
    %v493 = vpack.c.b16 %v424, %v423
    %v494 = vpack.c.b16 %v426, %v425
    %v495 = vpack.c.b16 %v428, %v427
    %v496 = vpack.c.b16 %v430, %v429
    %v497 = vpack.c.b16 %v432, %v431
    %v498 = vpack.c.b16 %v434, %v433
    %563 = vmatpush.bf16.msra.mxu0 %v442
    %564 = vmatpush.bf16.msra.mxu0 %v441
    %565 = vmatpush.bf16.msra.mxu0 %v440
    %566 = vmatpush.bf16.msra.mxu0 %v439
    %567 = vmatpush.bf16.msra.mxu0 %v438
    %568 = vmatpush.bf16.msra.mxu0 %v437
    %569 = vmatpush.bf16.msra.mxu0 %v436
    %570 = vmatpush.bf16.msra.mxu0 %v435
    %571 = vmatmul.bf16.gmra.mxu0 %v170
    %v572 = vpop.f32.mrf.mxu0
    %v573 = vadd.f32 %v178, %v572
    %v574 = vpop.f32.mrf.mxu0
    %575 = vdwg.mxu0
    %576 = vmatpush.bf16.msra.mxu0 %v450
    %577 = vmatpush.bf16.msra.mxu0 %v449
    %578 = vmatpush.bf16.msra.mxu0 %v448
    %579 = vmatpush.bf16.msra.mxu0 %v447
    %580 = vmatpush.bf16.msra.mxu0 %v446
    %581 = vmatpush.bf16.msra.mxu0 %v445
    %582 = vmatpush.bf16.msra.mxu0 %v444
    %583 = vmatpush.bf16.msra.mxu0 %v443
    %584 = vmatmul.bf16.gmra.mxu0 %v171
    %v585 = vpop.f32.mrf.mxu0
    %v586 = vadd.f32 %v573, %v585
    %v587 = vpop.f32.mrf.mxu0
    %588 = vdwg.mxu0
    %589 = vmatpush.bf16.msra.mxu0 %v458
    %590 = vmatpush.bf16.msra.mxu0 %v457
    %591 = vmatpush.bf16.msra.mxu0 %v456
    %592 = vmatpush.bf16.msra.mxu0 %v455
    %593 = vmatpush.bf16.msra.mxu0 %v454
    %594 = vmatpush.bf16.msra.mxu0 %v453
    %595 = vmatpush.bf16.msra.mxu0 %v452
    %596 = vmatpush.bf16.msra.mxu0 %v451
    %597 = vmatmul.bf16.gmra.mxu0 %v172
    %v598 = vpop.f32.mrf.mxu0
    %v599 = vadd.f32 %v586, %v598
    %v600 = vpop.f32.mrf.mxu0
    %601 = vdwg.mxu0
    %602 = vmatpush.bf16.msra.mxu0 %v466
    %603 = vmatpush.bf16.msra.mxu0 %v465
    %604 = vmatpush.bf16.msra.mxu0 %v464
    %605 = vmatpush.bf16.msra.mxu0 %v463
    %606 = vmatpush.bf16.msra.mxu0 %v462
    %607 = vmatpush.bf16.msra.mxu0 %v461
    %608 = vmatpush.bf16.msra.mxu0 %v460
    %609 = vmatpush.bf16.msra.mxu0 %v459
    %610 = vmatmul.bf16.gmra.mxu0 %v173
    %v611 = vpop.f32.mrf.mxu0
    %v612 = vadd.f32 %v599, %v611
    %v613 = vpop.f32.mrf.mxu0
    %614 = vdwg.mxu0
    %615 = vmatpush.bf16.msra.mxu0 %v474
    %616 = vmatpush.bf16.msra.mxu0 %v473
    %617 = vmatpush.bf16.msra.mxu0 %v472
    %618 = vmatpush.bf16.msra.mxu0 %v471
    %619 = vmatpush.bf16.msra.mxu0 %v470
    %620 = vmatpush.bf16.msra.mxu0 %v469
    %621 = vmatpush.bf16.msra.mxu0 %v468
    %622 = vmatpush.bf16.msra.mxu0 %v467
    %623 = vmatmul.bf16.gmra.mxu0 %v174
    %v624 = vpop.f32.mrf.mxu0
    %v625 = vadd.f32 %v612, %v624
    %v626 = vpop.f32.mrf.mxu0
    %627 = vdwg.mxu0
    %628 = vmatpush.bf16.msra.mxu0 %v482
    %629 = vmatpush.bf16.msra.mxu0 %v481
    %630 = vmatpush.bf16.msra.mxu0 %v480
    %631 = vmatpush.bf16.msra.mxu0 %v479
    %632 = vmatpush.bf16.msra.mxu0 %v478
    %633 = vmatpush.bf16.msra.mxu0 %v477
    %634 = vmatpush.bf16.msra.mxu0 %v476
    %635 = vmatpush.bf16.msra.mxu0 %v475
    %636 = vmatmul.bf16.gmra.mxu0 %v175
    %v637 = vpop.f32.mrf.mxu0
    %v638 = vadd.f32 %v625, %v637
    %v639 = vpop.f32.mrf.mxu0
    %640 = vdwg.mxu0
    %641 = vmatpush.bf16.msra.mxu0 %v490
    %642 = vmatpush.bf16.msra.mxu0 %v489
    %643 = vmatpush.bf16.msra.mxu0 %v488
    %644 = vmatpush.bf16.msra.mxu0 %v487
    %645 = vmatpush.bf16.msra.mxu0 %v486
    %646 = vmatpush.bf16.msra.mxu0 %v485
    %647 = vmatpush.bf16.msra.mxu0 %v484
    %648 = vmatpush.bf16.msra.mxu0 %v483
    %649 = vmatmul.bf16.gmra.mxu0 %v176
    %v650 = vpop.f32.mrf.mxu0
    %v651 = vadd.f32 %v638, %v650
    %v652 = vpop.f32.mrf.mxu0
    %653 = vdwg.mxu0
    %654 = vmatpush.bf16.msra.mxu0 %v498
    %655 = vmatpush.bf16.msra.mxu0 %v497
    %656 = vmatpush.bf16.msra.mxu0 %v496
    %657 = vmatpush.bf16.msra.mxu0 %v495
    %658 = vmatpush.bf16.msra.mxu0 %v494
    %659 = vmatpush.bf16.msra.mxu0 %v493
    %660 = vmatpush.bf16.msra.mxu0 %v492
    %661 = vmatpush.bf16.msra.mxu0 %v491
    %662 = vmatmul.bf16.gmra.mxu0 %v177
    %v663 = vpop.f32.mrf.mxu0
    %v664 = vadd.f32 %v651, %v663
    %v665 = vpop.f32.mrf.mxu0
    %666 = vdwg.mxu0
    %v667 = vmax.f32 %v664, 0.0
    %v668 = vld [vmem:[%s3] sm:$0xff]
    %v669 = vld [vmem:[%s3 + $0x8] sm:$0xff]
    %v670 = vld [vmem:[%s3 + $0x10] sm:$0xff]
    %v671 = vld [vmem:[%s3 + $0x18] sm:$0xff]
    %v672 = vperm.slane %v18, 1
    %vm673 = vcmask 261120
    %v675 = vsel %vm673, %v667, 0
    %677 = vmatpush.msra.mxu0 0.0
    %678 = vmatpush.msra.mxu0 0.0
    %679 = vmatpush.msra.mxu0 0.0
    %680 = vmatpush.msra.mxu0 0.0
    %681 = vmatpush.msra.mxu0 0.0
    %682 = vmatpush.msra.mxu0 0.0
    %683 = vmatpush.msra.mxu0 0.0
    %684 = vmatpush.msra.mxu0 0.0
    %685 = vmatpush.msra.mxu0 0.0
    %686 = vmatpush.msra.mxu0 0.0
    %687 = vmatpush.msra.mxu0 0.0
    %688 = vmatpush.msra.mxu0 0.0
    %689 = vmatpush.msra.mxu0 %v671
    %690 = vmatpush.msra.mxu0 %v670
    %691 = vmatpush.msra.mxu0 %v669
    %692 = vmatpush.msra.mxu0 %v668
    %693 = vmatmul.f32.gmra.mxu0 %v675
    %v694 = vpop.f32.mrf.mxu0
    %v695 = vadd.f32 %v672, %v694
    %696 = vdwg.mxu0
    %vm697 = vcmask 58368
    %698 = vst.msk [vmem:[#allocation2] sm:$0x3] %vm697, %v695
    // Predicated region
    $region18: #{tpu_custom_call.1} parent=1 // pred_check
      _
    $region19: #{tpu_custom_call.1} parent=1 // pred_check_branch
      %700 = sbr.rel (0) target = $region21
    $region20: #{tpu_custom_call.1} parent=1 // pred_region
      %702 = vsyncadd [#allocation3], 0
      %s704 = sshll.u32 [#allocation2], 4
      %s705 = int_to_ptr.vmem [resolvable:$true] %s704
      %s706 = sshll.u32 %s4, 4
      %s707 = int_to_ptr.hbm [resolvable:$true] %s706
      %709 = dma.vmem_to_hbm [thread:$0]  %s705, 32, %s707, [#allocation3]
    $region21: #{tpu_custom_call.1} parent=1 // pred_fallthru
      _
    // Predicated region
    $region22: #{tpu_custom_call.1} parent=1 // pred_check
      _
    $region23: #{tpu_custom_call.1} parent=1 // pred_check_branch
      %711 = sbr.rel (0) target = $region25
    $region24: #{tpu_custom_call.1} parent=1 // pred_region
      %713 = dma.done [#allocation3], 32
    $region25: #{tpu_custom_call.1} parent=1 // pred_fallthru
      _
    %714 = vsyncpa [#allocation3], 1

</llo_original>
